<compile_context>
chip_gen: v5e
topology: v5e:2x2
jax: 0.10.0
libtpu: 0.0.40
codegen_flags: <defaults>
</compile_context>

<pallas_src>
import functools

import jax
import jax.numpy as jnp
from jax.experimental import pallas as pl
from jax.experimental.pallas import tpu as pltpu

LANE = 128        # TPU vreg lane width
SUB_BF16 = 16     # bf16 sublane packing (rows per packed tile)
NEG_MASK = -1e30  # finite "minus infinity" for padded logit lanes


def _round_up(x, m):
    return (x + m - 1) // m * m


def mlp_logsoftmax_kernel(x_ref, p12_ref, p3_ref, o_ref, *, n_input, P_h,
                          r_w2, r_b1, r_b2, r_b3):
    # x tile: (TB, n_input) f32 -> bf16 operand for the MXU.
    x = x_ref[...].astype(jnp.bfloat16)

    # Static slices of the packed parameter buffers (zero runtime cost; bias rows
    # sit on 16-row sublane-tile boundaries).
    w1 = p12_ref[0:n_input, :]                           # (n_input, P_h) bf16
    w2 = p12_ref[r_w2:r_w2 + P_h, :]                     # (P_h, P_h) bf16
    b1 = p12_ref[r_b1:r_b1 + 1, :].astype(jnp.float32)   # (1, P_h)
    b2 = p12_ref[r_b2:r_b2 + 1, :].astype(jnp.float32)   # (1, P_h)
    w3 = p3_ref[0:P_h, :]                                # (P_h, P_out) bf16
    b3 = p3_ref[r_b3:r_b3 + 1, :].astype(jnp.float32)    # (1, P_out), padded lanes = -1e30

    # Layer 1: Linear + ReLU (MXU bf16 matmul, f32 accumulate; elementwise f32).
    h1 = jnp.maximum(jnp.dot(x, w1, preferred_element_type=jnp.float32) + b1, 0.0)

    # Layer 2: Linear + ReLU.
    h2 = jnp.maximum(
        jnp.dot(h1.astype(jnp.bfloat16), w2, preferred_element_type=jnp.float32) + b2,
        0.0)

    # Layer 3: Linear. Padded logit columns get 0 (zero w3 cols) + (-1e30) from the
    # baked b3 mask, so they vanish from the softmax normalizer for free.
    logits = jnp.dot(h2.astype(jnp.bfloat16), w3,
                     preferred_element_type=jnp.float32) + b3

    # Numerically-stable log_softmax over the feature axis (dim=1 in PyTorch).
    m = jnp.max(logits, axis=-1, keepdims=True)
    shifted = logits - m
    lse = jnp.log(jnp.sum(jnp.exp(shifted), axis=-1, keepdims=True))
    o_ref[...] = (shifted - lse).astype(o_ref.dtype)


def pack_params(w1, b1, w2, b2, w3, b3):
    """Pack parameters into two lane-padded bf16 buffers.

    Buffer p12 (width P_h = max(round_up(n1,128), round_up(n2,128))): w1, w2, b1, b2.
    Buffer p3  (width P_out = round_up(n_out,128)): w3, b3 (padded lanes of the b3
    row pre-poisoned with -1e30 so the kernel needs no explicit logit mask).

    Weight layout is (in_features, out_features) so the kernel computes x @ W + b
    (equivalent to PyTorch's x @ W.T with W of shape (out, in)).
    """
    n_input, n1 = w1.shape
    n2 = w2.shape[1]
    n_out = w3.shape[1]
    P_h = max(_round_up(n1, LANE), _round_up(n2, LANE))
    P_out = _round_up(n_out, LANE)

    # --- buffer for layers 1 & 2 (width P_h) ---
    r_w2 = _round_up(n_input, SUB_BF16)
    r_b1 = r_w2 + P_h                 # P_h is a multiple of 128 -> 16-row aligned
    r_b2 = r_b1 + SUB_BF16
    rows12 = r_b2 + SUB_BF16

    p12 = jnp.zeros((rows12, P_h), jnp.float32)
    p12 = p12.at[0:n_input, :n1].set(w1)
    p12 = p12.at[r_w2:r_w2 + n1, :n2].set(w2)
    p12 = p12.at[r_b1, :n1].set(jnp.reshape(b1, (-1,)))
    p12 = p12.at[r_b2, :n2].set(jnp.reshape(b2, (-1,)))
    p12 = p12.astype(jnp.bfloat16)

    # --- buffer for layer 3 (width P_out) ---
    r_b3 = P_h                        # multiple of 128 -> aligned
    rows3 = r_b3 + SUB_BF16

    p3 = jnp.zeros((rows3, P_out), jnp.float32)
    p3 = p3.at[0:n2, :n_out].set(w3)
    p3 = p3.at[r_b3, :].set(NEG_MASK)               # bake softmax mask into bias row
    p3 = p3.at[r_b3, :n_out].set(jnp.reshape(b3, (-1,)))
    p3 = p3.astype(jnp.bfloat16)

    meta = dict(n_input=n_input, P_h=P_h, r_w2=r_w2, r_b1=r_b1, r_b2=r_b2, r_b3=r_b3)
    return p12, p3, P_out, n_out, meta


def mlp_forward(x, w1, b1, w2, b2, w3, b3, *, block_b=2048,
                out_dtype=jnp.float32, unpad=True):
    """Forward pass of the 3-layer MLP + log_softmax.

    unpad=True  -> returns (B, n_out) f.p. log-probs (module semantics).
    unpad=False -> returns the lane-padded (Bp, P_out) buffer (valid region
                   [:B, :n_out]); skips the extra full-HBM-pass slice for
                   consumers that can slice/mask downstream.
    out_dtype   -> jnp.bfloat16 halves output HBM writeback if tolerated.
    """
    B, n_input = x.shape
    p12, p3, P_out, n_out, meta = pack_params(w1, b1, w2, b2, w3, b3)
    P_h = meta["P_h"]

    # Batch tile: large to amortize the ~0.35 us per-grid-step overhead.
    if B >= 256:
        TB = min(_round_up(block_b, 256), _round_up(B, 256))
    else:
        TB = min(_round_up(block_b, 8), _round_up(B, 8))
    # Cap TB so the "parallel" grid has >= 2 steps whenever the batch allows:
    # v7x has 2 TensorCores/chip and a length-1 parallel grid would idle one.
    if B > 8:
        TB = min(TB, max(8, _round_up((B + 1) // 2, 8)))
    Bp = _round_up(B, TB)
    if Bp != B:
        x = jnp.pad(x, ((0, Bp - B), (0, 0)))

    # VMEM budget: double-buffered x/out tiles + resident params + f32 intermediates.
    out_itemsize = jnp.dtype(out_dtype).itemsize
    vmem_need = (2 * TB * n_input * 4
                 + 2 * TB * P_out * out_itemsize
                 + 2 * (p12.size + p3.size) * 2
                 + 4 * TB * P_h * 4)
    vmem_limit = int(min(max(32 << 20, _round_up(vmem_need, 1 << 20) + (8 << 20)),
                         64 << 20))

    kernel = functools.partial(mlp_logsoftmax_kernel, **meta)

    out = pl.pallas_call(
        kernel,
        out_shape=jax.ShapeDtypeStruct((Bp, P_out), out_dtype),
        grid_spec=pltpu.PrefetchScalarGridSpec(
            num_scalar_prefetch=0,
            grid=(Bp // TB,),
            in_specs=[
                pl.BlockSpec((TB, n_input), lambda i: (i, 0)),   # streamed x tile
                pl.BlockSpec(p12.shape, lambda i: (0, 0)),       # resident params L1/L2
                pl.BlockSpec(p3.shape, lambda i: (0, 0)),        # resident params L3
            ],
            out_specs=pl.BlockSpec((TB, P_out), lambda i: (i, 0)),  # lane-dense output
        ),
        compiler_params=pltpu.CompilerParams(
            dimension_semantics=("parallel",),
            vmem_limit_bytes=vmem_limit,
        ),
    )(x, p12, p3)

    if unpad:
        # NOTE: this slice is a separate XLA copy pass; for perf-critical chains
        # call with unpad=False and slice/mask at the consumer instead.
        return out[:B, :n_out]
    return out


def init_params(key, n_input, n1, n2, n_output):
    """Deterministic init mimicking nn.Linear's U(-1/sqrt(fan_in), 1/sqrt(fan_in))."""
    ks = jax.random.split(key, 6)

    def lin(kw, kb, fan_in, fan_out):
        bound = 1.0 / jnp.sqrt(fan_in)
        w = jax.random.uniform(kw, (fan_in, fan_out), jnp.float32, -bound, bound)
        b = jax.random.uniform(kb, (fan_out,), jnp.float32, -bound, bound)
        return w, b

    w1, b1 = lin(ks[0], ks[1], n_input, n1)
    w2, b2 = lin(ks[2], ks[3], n1, n2)
    w3, b3 = lin(ks[4], ks[5], n2, n_output)
    return w1, b1, w2, b2, w3, b3


if __name__ == "__main__":
    # Small shapes consistent with the module's forward: x is (batch, n_input).
    B, n_input, n1, n2, n_output = 64, 16, 32, 32, 8

    key = jax.random.PRNGKey(0)
    kx, kp = jax.random.split(key)
    x = jax.random.normal(kx, (B, n_input), jnp.float32)
    params = init_params(kp, n_input, n1, n2, n_output)

    # With B=64, TB is capped to 32 -> grid=(2,): exercises the batch grid
    # (and both TCs on v7x) with resident packed weights.
    out = mlp_forward(x, *params)
    jax.block_until_ready(out)
    assert out.shape == (B, n_output)
    assert bool(jnp.all(jnp.isfinite(out)))

    # Reference with the same bf16 weight/activation quantization + f32 accumulate.
    w1, b1, w2, b2, w3, b3 = params
    q = lambda a: a.astype(jnp.bfloat16)
    f = lambda a: a.astype(jnp.float32)
    h = jnp.maximum(jnp.dot(q(x), q(w1), preferred_element_type=jnp.float32) + f(q(b1)), 0.0)
    h = jnp.maximum(jnp.dot(q(h), q(w2), preferred_element_type=jnp.float32) + f(q(b2)), 0.0)
    logits = jnp.dot(q(h), q(w3), preferred_element_type=jnp.float32) + f(q(b3))
    ref = jax.nn.log_softmax(logits, axis=1)

    assert jnp.allclose(out, ref, atol=2e-3, rtol=2e-3), "mismatch vs reference"

    # Also exercise the padded / no-slice fast path once (perf-recommended mode).
    out_padded = mlp_forward(x, *params, unpad=False)
    jax.block_until_ready(out_padded)
    assert jnp.allclose(out_padded[:B, :n_output], ref, atol=2e-3, rtol=2e-3)

    print("KERNEL_OK")
</pallas_src>

<mosaic_0001>
module attributes {stable_mosaic.version = 11 : i64} {
  func.func @mlp_logsoftmax_kernel(%arg0: i32, %arg1: memref<32x16xf32, #tpu.memory_space<vmem>>, %arg2: memref<176x128xbf16, #tpu.memory_space<vmem>>, %arg3: memref<144x128xbf16, #tpu.memory_space<vmem>>, %arg4: memref<32x128xf32, #tpu.memory_space<vmem>>) attributes {dimension_semantics = [#tpu.dimension_semantics<parallel>], iteration_bounds = array<i64: 2>, scalar_prefetch = 0 : i64, scratch_operands = 0 : i64, tpu.core_type = #tpu.core_type<tc>, window_params = [{transform_indices = @transform_0, window_bounds = array<i64: 32, 16>}, {pipeline_mode = #tpu.pipeline_mode<synchronous>, transform_indices = @transform_1, window_bounds = array<i64: 176, 128>}, {pipeline_mode = #tpu.pipeline_mode<synchronous>, transform_indices = @transform_2, window_bounds = array<i64: 144, 128>}, {transform_indices = @transform_3, window_bounds = array<i64: 32, 128>}]} {
    %c0 = arith.constant 0 : index
    %c0_0 = arith.constant 0 : index
    %0 = vector.load %arg1[%c0, %c0_0] : memref<32x16xf32, #tpu.memory_space<vmem>>, vector<32x16xf32>
    %1 = arith.truncf %0 : vector<32x16xf32> to vector<32x16xbf16>
    %c0_1 = arith.constant 0 : index
    %c0_2 = arith.constant 0 : index
    %2 = vector.load %arg2[%c0_1, %c0_2] : memref<176x128xbf16, #tpu.memory_space<vmem>>, vector<16x128xbf16>
    %c16 = arith.constant 16 : index
    %c0_3 = arith.constant 0 : index
    %3 = vector.load %arg2[%c16, %c0_3] : memref<176x128xbf16, #tpu.memory_space<vmem>>, vector<128x128xbf16>
    %c144 = arith.constant 144 : index
    %c0_4 = arith.constant 0 : index
    %4 = vector.load %arg2[%c144, %c0_4] : memref<176x128xbf16, #tpu.memory_space<vmem>>, vector<1x128xbf16>
    %5 = arith.extf %4 : vector<1x128xbf16> to vector<1x128xf32>
    %c160 = arith.constant 160 : index
    %c0_5 = arith.constant 0 : index
    %6 = vector.load %arg2[%c160, %c0_5] : memref<176x128xbf16, #tpu.memory_space<vmem>>, vector<1x128xbf16>
    %7 = arith.extf %6 : vector<1x128xbf16> to vector<1x128xf32>
    %c0_6 = arith.constant 0 : index
    %c0_7 = arith.constant 0 : index
    %8 = vector.load %arg3[%c0_6, %c0_7] : memref<144x128xbf16, #tpu.memory_space<vmem>>, vector<128x128xbf16>
    %c128 = arith.constant 128 : index
    %c0_8 = arith.constant 0 : index
    %9 = vector.load %arg3[%c128, %c0_8] : memref<144x128xbf16, #tpu.memory_space<vmem>>, vector<1x128xbf16>
    %10 = arith.extf %9 : vector<1x128xbf16> to vector<1x128xf32>
    %cst = arith.constant dense<0.000000e+00> : vector<32x128xf32>
    %11 = tpu.matmul %1, %2, %cst {dimension_numbers = #tpu.dot_dimension_numbers<[1], [0], [0], [1], [0, 0, 1, 1], [], []>} : vector<32x16xbf16>, vector<16x128xbf16>, vector<32x128xf32> -> vector<32x128xf32>
    %12 = vector.broadcast %5 : vector<1x128xf32> to vector<32x128xf32>
    %13 = arith.addf %11, %12 : vector<32x128xf32>
    %cst_9 = arith.constant 0.000000e+00 : f32
    %14 = vector.broadcast %cst_9 : f32 to vector<32x128xf32>
    %15 = arith.maximumf %13, %14 : vector<32x128xf32>
    %16 = arith.truncf %15 : vector<32x128xf32> to vector<32x128xbf16>
    %cst_10 = arith.constant dense<0.000000e+00> : vector<32x128xf32>
    %17 = tpu.matmul %16, %3, %cst_10 {dimension_numbers = #tpu.dot_dimension_numbers<[1], [0], [0], [1], [0, 0, 1, 1], [], []>} : vector<32x128xbf16>, vector<128x128xbf16>, vector<32x128xf32> -> vector<32x128xf32>
    %18 = vector.broadcast %7 : vector<1x128xf32> to vector<32x128xf32>
    %19 = arith.addf %17, %18 : vector<32x128xf32>
    %cst_11 = arith.constant 0.000000e+00 : f32
    %20 = vector.broadcast %cst_11 : f32 to vector<32x128xf32>
    %21 = arith.maximumf %19, %20 : vector<32x128xf32>
    %22 = arith.truncf %21 : vector<32x128xf32> to vector<32x128xbf16>
    %cst_12 = arith.constant dense<0.000000e+00> : vector<32x128xf32>
    %23 = tpu.matmul %22, %8, %cst_12 {dimension_numbers = #tpu.dot_dimension_numbers<[1], [0], [0], [1], [0, 0, 1, 1], [], []>} : vector<32x128xbf16>, vector<128x128xbf16>, vector<32x128xf32> -> vector<32x128xf32>
    %24 = vector.broadcast %10 : vector<1x128xf32> to vector<32x128xf32>
    %25 = arith.addf %23, %24 : vector<32x128xf32>
    %cst_13 = arith.constant dense<0xFF800000> : vector<32xf32>
    %26 = vector.multi_reduction <maximumf>, %25, %cst_13 [1] : vector<32x128xf32> to vector<32xf32>
    %27 = vector.shape_cast %26 : vector<32xf32> to vector<32x1xf32>
    %28 = vector.broadcast %27 : vector<32x1xf32> to vector<32x128xf32>
    %29 = arith.subf %25, %28 : vector<32x128xf32>
    %30 = math.exp %29 : vector<32x128xf32>
    %cst_14 = arith.constant dense<0.000000e+00> : vector<32xf32>
    %31 = vector.multi_reduction <add>, %30, %cst_14 [1] : vector<32x128xf32> to vector<32xf32>
    %32 = vector.shape_cast %31 : vector<32xf32> to vector<32x1xf32>
    %33 = math.log %32 : vector<32x1xf32>
    %34 = vector.broadcast %33 : vector<32x1xf32> to vector<32x128xf32>
    %35 = arith.subf %29, %34 : vector<32x128xf32>
    %c0_15 = arith.constant 0 : index
    %c0_16 = arith.constant 0 : index
    %36 = vector.load %arg4[%c0_15, %c0_16] : memref<32x128xf32, #tpu.memory_space<vmem>>, vector<32x128xf32>
    tpu.vector_store %arg4[%c0_15, %c0_16], %35 {strides = array<i32>} : memref<32x128xf32, #tpu.memory_space<vmem>>, vector<32x128xf32>,
    return
  }
  func.func @transform_0(%arg0: i32) -> (i32, i32) {
    %c0_i32 = arith.constant 0 : i32
    %c0_i32_0 = arith.constant 0 : i32
    return %arg0, %c0_i32 : i32, i32
  }
  func.func @transform_1(%arg0: i32) -> (i32, i32) {
    %c0_i32 = arith.constant 0 : i32
    %c0_i32_0 = arith.constant 0 : i32
    %c0_i32_1 = arith.constant 0 : i32
    return %c0_i32, %c0_i32_0 : i32, i32
  }
  func.func @transform_2(%arg0: i32) -> (i32, i32) {
    %c0_i32 = arith.constant 0 : i32
    %c0_i32_0 = arith.constant 0 : i32
    %c0_i32_1 = arith.constant 0 : i32
    return %c0_i32, %c0_i32_0 : i32, i32
  }
  func.func @transform_3(%arg0: i32) -> (i32, i32) {
    %c0_i32 = arith.constant 0 : i32
    %c0_i32_0 = arith.constant 0 : i32
    return %arg0, %c0_i32 : i32, i32
  }
}

</mosaic_0001>

<llo_original>
// kernel: tpu_custom_call.1
$region0: #{tpu_custom_call.1}
  #allocation0 [shape = 'u32[]', space=smem, size = 0x4, offset = 0x4, fixed_abs, tag = 'smem constant byte address 0x4 - core index']
  #allocation1 [shape = 'u32[72,128]{1,0:T(1,128)}', space=vmem, size = 0x9000, scoped, tag = 'internal scratch']
  %s0 = inlined_call_operand.vmem [shape: f32[64,16], index: 0, kind: input, shape index: {}]
  %s1 = inlined_call_operand.hbm [shape: bf16[176,128], index: 1, kind: input, shape index: {}]
  %s2 = inlined_call_operand.vmem [shape: bf16[144,128], index: 2, kind: input, shape index: {}]
  %s3 = inlined_call_operand.hbm [shape: f32[64,128], index: 3, kind: output, shape index: {}]
  %s4 = sld [smem:[#allocation0]]
  $region49: #{tpu_custom_call.1} parent=0
    _
  %s6 = ssub.s32 1, %s4
  %s7 = scalar_select 0, %s6, %s4
  $region1: #{tpu_custom_call.1} parent=0
    #allocation2 [shape = 'u8[45056]{0}', space=vmem, size = 0xb000, scoped, tag = 'input window, operand 1, single buffered']
    #allocation3 [shape = 's32[2]{0}', space=sflag, size = 0x8, scoped, tag = 'scoped memory for tpu_custom_call.1']
    #allocation4 [shape = 's32[2]{0}', space=sflag, size = 0x8, scoped, tag = 'scoped memory for tpu_custom_call.1']
    #allocation5 [shape = 'u8[32768]{0}', space=vmem, size = 0x8000, scoped, tag = 'output window, operand 0']
    %8 = vsyncpa [#allocation3], 0
    %9 = vsyncpa [#allocation4], 0
    %s10 = scalar_lea.sflag [#allocation4], 1
    %11 = vsyncpa %s10, 0
    loop: start=0, step=1, limit=4
    $region2: #{tpu_custom_call.1} parent=1 // loop_pre_header
      _
    $region3: #{tpu_custom_call.1} parent=1 // loop_header
      %s13 = sphi 0, %s17
      %p14 = scmp.ge.s32.totalorder %s13, 4
      %s23 = sphi 0, %s25
      %s26 = sphi 0, %s23
      %s27 = sphi 0, %s26
      %s43 = sphi 0, %s27
      %s47 = sphi 0, %s47
      %s49 = sphi 0, %s47
      %s50 = sphi 0, %s49
      %s64 = sphi 0, %s50
      %s68 = sphi 0, %s68
      %s70 = sphi 0, %s68
      %s71 = sphi 0, %s70
      %s85 = sphi 0, %s71
      %s91 = sphi 0, %s93
      %s94 = sphi 0, %s91
      %s95 = sphi 0, %s94
      %s111 = sphi 0, %s95
    $region4: #{tpu_custom_call.1} parent=1 // loop_header_branch
      %16 = sbr.rel (%p14) target = $region8
    $region5: #{tpu_custom_call.1} parent=1 // loop_body
      %s18 = ssub.s32 %s13, 1
      %s19 = ssub.s32 %s13, 2
      %s20 = sadd.s32 %s13, 1
      %s21 = ssub.s32 %s13, %s20
      %p22 = scmp.eq.s32.totalorder %s21, 0
      %s24 = sadd.s32 %s23, 1
      %s25 = scalar_select %p22, %s23, %s24
      %p28 = pneg %p22
      %p29 = scmp.eq.s32.totalorder %s13, 1
      %p30 = por %p28, %p29
      %p31 = scmp.ne.s32.totalorder %s23, %s26
      %p32 = scmp.eq.s32.totalorder %s13, 0
      %p33 = por %p31, %p32
      %p34 = scmp.ne.s32.totalorder %s23, %s26
      %p35 = scmp.eq.s32.totalorder %s18, 1
      %p36 = por %p34, %p35
      %p37 = scmp.ne.s32.totalorder %s26, %s27
      %p38 = scmp.eq.s32.totalorder %s18, 0
      %p39 = por %p37, %p38
      %p40 = scmp.ne.s32.totalorder %s26, %s27
      %p41 = scmp.eq.s32.totalorder %s19, 1
      %p42 = por %p40, %p41
      %p44 = scmp.ne.s32.totalorder %s27, %s43
      %p45 = scmp.eq.s32.totalorder %s19, 0
      %p46 = por %p44, %p45
      %s48 = sadd.s32 %s47, 1
      %p51 = scmp.eq.s32.totalorder %s13, 1
      %p52 = scmp.ne.s32.totalorder %s47, %s49
      %p53 = scmp.eq.s32.totalorder %s13, 0
      %p54 = por %p52, %p53
      %p55 = scmp.ne.s32.totalorder %s47, %s49
      %p56 = scmp.eq.s32.totalorder %s18, 1
      %p57 = por %p55, %p56
      %p58 = scmp.ne.s32.totalorder %s49, %s50
      %p59 = scmp.eq.s32.totalorder %s18, 0
      %p60 = por %p58, %p59
      %p61 = scmp.ne.s32.totalorder %s49, %s50
      %p62 = scmp.eq.s32.totalorder %s19, 1
      %p63 = por %p61, %p62
      %p65 = scmp.ne.s32.totalorder %s50, %s64
      %p66 = scmp.eq.s32.totalorder %s19, 0
      %p67 = por %p65, %p66
      %s69 = sadd.s32 %s68, 1
      %p72 = scmp.eq.s32.totalorder %s13, 1
      %p73 = scmp.ne.s32.totalorder %s68, %s70
      %p74 = scmp.eq.s32.totalorder %s13, 0
      %p75 = por %p73, %p74
      %p76 = scmp.ne.s32.totalorder %s68, %s70
      %p77 = scmp.eq.s32.totalorder %s18, 1
      %p78 = por %p76, %p77
      %p79 = scmp.ne.s32.totalorder %s70, %s71
      %p80 = scmp.eq.s32.totalorder %s18, 0
      %p81 = por %p79, %p80
      %p82 = scmp.ne.s32.totalorder %s70, %s71
      %p83 = scmp.eq.s32.totalorder %s19, 1
      %p84 = por %p82, %p83
      %p86 = scmp.ne.s32.totalorder %s71, %s85
      %p87 = scmp.eq.s32.totalorder %s19, 0
      %p88 = por %p86, %p87
      %s89 = ssub.s32 %s13, %s20
      %p90 = scmp.eq.s32.totalorder %s89, 0
      %s92 = sadd.s32 %s91, 1
      %s93 = scalar_select %p90, %s91, %s92
      %p96 = pneg %p90
      %p97 = scmp.eq.s32.totalorder %s13, 1
      %p98 = por %p96, %p97
      %p99 = scmp.ne.s32.totalorder %s91, %s94
      %p100 = scmp.eq.s32.totalorder %s13, 0
      %p101 = por %p99, %p100
      %p102 = scmp.ne.s32.totalorder %s91, %s94
      %p103 = scmp.eq.s32.totalorder %s18, 1
      %p104 = por %p102, %p103
      %p105 = scmp.ne.s32.totalorder %s94, %s95
      %p106 = scmp.eq.s32.totalorder %s18, 0
      %p107 = por %p105, %p106
      %p108 = scmp.ne.s32.totalorder %s94, %s95
      %p109 = scmp.eq.s32.totalorder %s19, 1
      %p110 = por %p108, %p109
      %p112 = scmp.ne.s32.totalorder %s95, %s111
      %p113 = scmp.eq.s32.totalorder %s19, 0
      %p114 = por %p112, %p113
      %p115 = scmp.le.s32.totalorder 1, %s13
      %p116 = scmp.lt.s32.totalorder %s13, 3
      %p117 = pnand %p115, %p116
      %p118 = pneg %p117
      // Predicated region
      $region9: #{tpu_custom_call.1} parent=5 // pred_check
        _
      $region10: #{tpu_custom_call.1} parent=5 // pred_check_branch
        %120 = sbr.rel (%p117) target = $region12
      $region11: #{tpu_custom_call.1} parent=5 // pred_region
        %s121 = ssub.s32 %s13, 1
        // Predicated region
        $region13: #{tpu_custom_call.1} parent=11 // pred_check
          %p122 = pneg %p60
        $region14: #{tpu_custom_call.1} parent=11 // pred_check_branch
          %124 = sbr.rel (%p122) target = $region16
        $region15: #{tpu_custom_call.1} parent=11 // pred_region
          %126 = vsyncadd [#allocation3], 0
          %s127 = sshll.u32 %s1, 4
          %s128 = int_to_ptr.hbm [resolvable:$true] %s127
          %s129 = sshll.u32 [#allocation2], 4
          %s130 = int_to_ptr.vmem [resolvable:$true] %s129
          %135 = dma.hbm_to_vmem [thread:$0]  %s128, 1408, %s130, [#allocation3], 64, 64, 4
        $region16: #{tpu_custom_call.1} parent=11 // pred_fallthru
          _
        // Predicated region
        $region17: #{tpu_custom_call.1} parent=11 // pred_check
          %p136 = pneg %p81
        $region18: #{tpu_custom_call.1} parent=11 // pred_check_branch
          %138 = sbr.rel (%p136) target = $region20
        $region19: #{tpu_custom_call.1} parent=11 // pred_region
          _
        $region20: #{tpu_custom_call.1} parent=11 // pred_fallthru
          _
      $region12: #{tpu_custom_call.1} parent=5 // pred_fallthru
        _
      %p139 = scmp.lt.s32.totalorder %s13, 2
      // Predicated region
      $region21: #{tpu_custom_call.1} parent=5 // pred_check
        %p140 = pneg %p139
      $region22: #{tpu_custom_call.1} parent=5 // pred_check_branch
        %142 = sbr.rel (%p140) target = $region24
      $region23: #{tpu_custom_call.1} parent=5 // pred_region
        // Predicated region
        $region25: #{tpu_custom_call.1} parent=23 // pred_check
          %p143 = pneg %p33
        $region26: #{tpu_custom_call.1} parent=23 // pred_check_branch
          %145 = sbr.rel (%p143) target = $region28
        $region27: #{tpu_custom_call.1} parent=23 // pred_region
          %s146 = smul.u32 4, %s13
          %p147 = scmp.lt.s32.totalorder %s146, 7
          %s148 = scalar_select %p147, %s146, 7
          %s149 = smul.addr %s148, 8
          %s150 = scalar_lea.vmem %s0, %s149
          %s151 = smul.u32 4, %s13
        $region28: #{tpu_custom_call.1} parent=23 // pred_fallthru
          _
      $region24: #{tpu_custom_call.1} parent=5 // pred_fallthru
        _
      %p152 = scmp.le.s32.totalorder 1, %s13
      %p153 = scmp.lt.s32.totalorder %s13, 3
      %p154 = pnand %p152, %p153
      %p155 = pneg %p154
      // Predicated region
      $region29: #{tpu_custom_call.1} parent=5 // pred_check
        _
      $region30: #{tpu_custom_call.1} parent=5 // pred_check_branch
        %157 = sbr.rel (%p154) target = $region32
      $region31: #{tpu_custom_call.1} parent=5 // pred_region
        %s158 = ssub.s32 %s13, 1
        // Predicated region
        $region33: #{tpu_custom_call.1} parent=31 // pred_check
          %p159 = pneg %p60
        $region34: #{tpu_custom_call.1} parent=31 // pred_check_branch
          %161 = sbr.rel (%p159) target = $region36
        $region35: #{tpu_custom_call.1} parent=31 // pred_region
          %163 = dma.done [#allocation3], 1408
        $region36: #{tpu_custom_call.1} parent=31 // pred_fallthru
          _
        %s164 = smul.u32 4, %s18
        %p165 = scmp.lt.s32.totalorder %s164, 7
        %s166 = scalar_select %p165, %s164, 7
        %s167 = smul.addr %s166, 8
        %s168 = scalar_lea.vmem %s0, %s167
        %p169 = pneg %p39
        %p170 = pneg %p36
        %p171 = pneg %p60
        %p172 = pneg %p57
        %p173 = pneg %p81
        %p174 = pneg %p78
        %p175 = pneg %p107
        %p176 = pneg %p104
        %s177 = sand.u32 %s94, 1
        %s178 = scalar_lea.sflag [#allocation4], %s177
        %s179 = sand.u32 %s94, 1
        %s180 = smul.addr %s179, 32
        %s181 = scalar_lea.vmem [#allocation5], %s180
        %s182 = smul.u32 4, %s18
        %p183 = scmp.lt.s32.totalorder %s182, 7
        %s184 = scalar_select %p183, %s182, 7
        %s185 = smul.addr %s184, 8
        %s186 = scalar_lea.vmem %s0, %s185
        %s187 = smul.u32 4, %s18
        %s188 = smul.u32 4, %s18
        %v190 = vld [vmem:[%s186] sm:$0xff]
        %v191 = vld [vmem:[%s186 + $0x8] sm:$0xff]
        %v192 = vld [vmem:[%s186 + $0x10] sm:$0xff]
        %v193 = vld [vmem:[%s186 + $0x18] sm:$0xff]
        %v194 = vpack.c.bf16 %v191, %v190
        %v195 = vpack.c.bf16 %v193, %v192
        %v196 = vld [vmem:[#allocation2] sm:$0xf]
        %v197 = vld [vmem:[#allocation2 + $0x4] sm:$0xf]
        %v198 = vld [vmem:[#allocation2 + $0x8] sm:$0xf]
        %v199 = vld [vmem:[#allocation2 + $0xc] sm:$0xf]
        %v200 = vld [vmem:[#allocation2 + $0x10] sm:$0xf]
        %v201 = vld [vmem:[#allocation2 + $0x14] sm:$0xf]
        %v202 = vld [vmem:[#allocation2 + $0x18] sm:$0xf]
        %v203 = vld [vmem:[#allocation2 + $0x1c] sm:$0xf]
        %v204 = vld [vmem:[#allocation2 + $0x20] sm:$0xf]
        %v205 = vld [vmem:[#allocation2 + $0x24] sm:$0xf]
        %v206 = vld [vmem:[#allocation2 + $0x28] sm:$0xf]
        %v207 = vld [vmem:[#allocation2 + $0x2c] sm:$0xf]
        %v208 = vld [vmem:[#allocation2 + $0x30] sm:$0xf]
        %v209 = vld [vmem:[#allocation2 + $0x34] sm:$0xf]
        %v210 = vld [vmem:[#allocation2 + $0x38] sm:$0xf]
        %v211 = vld [vmem:[#allocation2 + $0x3c] sm:$0xf]
        %v212 = vld [vmem:[#allocation2 + $0x40] sm:$0xf]
        %v213 = vld [vmem:[#allocation2 + $0x44] sm:$0xf]
        %v214 = vld [vmem:[#allocation2 + $0x48] sm:$0x1]
        %v215 = vunpack.c.l.bf16 %v214
        %v216 = vld [vmem:[#allocation2 + $0x50] sm:$0x1]
        %v217 = vunpack.c.l.bf16 %v216
        %v218 = vld [vmem:[%s2] sm:$0xf]
        %v219 = vld [vmem:[%s2 + $0x4] sm:$0xf]
        %v220 = vld [vmem:[%s2 + $0x8] sm:$0xf]
        %v221 = vld [vmem:[%s2 + $0xc] sm:$0xf]
        %v222 = vld [vmem:[%s2 + $0x10] sm:$0xf]
        %v223 = vld [vmem:[%s2 + $0x14] sm:$0xf]
        %v224 = vld [vmem:[%s2 + $0x18] sm:$0xf]
        %v225 = vld [vmem:[%s2 + $0x1c] sm:$0xf]
        %v226 = vld [vmem:[%s2 + $0x20] sm:$0xf]
        %v227 = vld [vmem:[%s2 + $0x24] sm:$0xf]
        %v228 = vld [vmem:[%s2 + $0x28] sm:$0xf]
        %v229 = vld [vmem:[%s2 + $0x2c] sm:$0xf]
        %v230 = vld [vmem:[%s2 + $0x30] sm:$0xf]
        %v231 = vld [vmem:[%s2 + $0x34] sm:$0xf]
        %v232 = vld [vmem:[%s2 + $0x38] sm:$0xf]
        %v233 = vld [vmem:[%s2 + $0x3c] sm:$0xf]
        %v234 = vld [vmem:[%s2 + $0x40] sm:$0x1]
        %v235 = vunpack.c.l.bf16 %v234
        %v236 = vperm.slane %v215, 0
        %v239 = vunpack.c.l.b16 %v196
        %v240 = vunpack.c.l.b16 %v197
        %v241 = vpack.c.b16 %v240, %v239
        %vm243 = vcmask 130048
        %v245 = vsel %vm243, %v194, 0
        %v248 = vsel %vm243, %v195, 0
        %250 = vmatpush.bf16.msra.mxu0 0
        %251 = vmatpush.bf16.msra.mxu0 0
        %252 = vmatpush.bf16.msra.mxu0 0
        %253 = vmatpush.bf16.msra.mxu0 0
        %254 = vmatpush.bf16.msra.mxu0 0
        %255 = vmatpush.bf16.msra.mxu0 0
        %256 = vmatpush.bf16.msra.mxu0 0
        %257 = vmatpush.bf16.msra.mxu0 %v241
        %258 = vmatmul.bf16.gmra.mxu0 %v245
        %v259 = vpop.f32.mrf.mxu0
        %v260 = vadd.f32 %v236, %v259
        %v261 = vpop.f32.mrf.mxu0
        %v262 = vadd.f32 %v236, %v261
        %263 = vmatmul.bf16.gmra.mxu0 %v248
        %v264 = vpop.f32.mrf.mxu0
        %v265 = vadd.f32 %v236, %v264
        %v266 = vpop.f32.mrf.mxu0
        %v267 = vadd.f32 %v236, %v266
        %268 = vdwg.mxu0
        %v269 = vmax.f32 %v260, 0.0
        %v270 = vmax.f32 %v262, 0.0
        %v271 = vmax.f32 %v265, 0.0
        %v272 = vmax.f32 %v267, 0.0
        %v273 = vpack.c.bf16 %v270, %v269
        %v274 = vpack.c.bf16 %v272, %v271
        %v275 = vperm.slane %v217, 0
        %v292 = vunpack.c.l.b16 %v198
        %v293 = vunpack.c.l.b16 %v199
        %v294 = vunpack.c.l.b16 %v200
        %v295 = vunpack.c.l.b16 %v201
        %v296 = vunpack.c.l.b16 %v202
        %v297 = vunpack.c.l.b16 %v203
        %v298 = vunpack.c.l.b16 %v204
        %v299 = vunpack.c.l.b16 %v205
        %v300 = vunpack.c.l.b16 %v206
        %v301 = vunpack.c.l.b16 %v207
        %v302 = vunpack.c.l.b16 %v208
        %v303 = vunpack.c.l.b16 %v209
        %v304 = vunpack.c.l.b16 %v210
        %v305 = vunpack.c.l.b16 %v211
        %v306 = vunpack.c.l.b16 %v212
        %v307 = vunpack.c.l.b16 %v213
        %v308 = vpack.c.b16 %v293, %v292
        %v309 = vpack.c.b16 %v295, %v294
        %v310 = vpack.c.b16 %v297, %v296
        %v311 = vpack.c.b16 %v299, %v298
        %v312 = vpack.c.b16 %v301, %v300
        %v313 = vpack.c.b16 %v303, %v302
        %v314 = vpack.c.b16 %v305, %v304
        %v315 = vpack.c.b16 %v307, %v306
        %324 = vmatpush.bf16.msra.mxu0 %v315
        %325 = vmatpush.bf16.msra.mxu0 %v314
        %326 = vmatpush.bf16.msra.mxu0 %v313
        %327 = vmatpush.bf16.msra.mxu0 %v312
        %328 = vmatpush.bf16.msra.mxu0 %v311
        %329 = vmatpush.bf16.msra.mxu0 %v310
        %330 = vmatpush.bf16.msra.mxu0 %v309
        %331 = vmatpush.bf16.msra.mxu0 %v308
        %332 = vmatmul.bf16.gmra.mxu0 %v273
        %v333 = vpop.f32.mrf.mxu0
        %v334 = vadd.f32 %v275, %v333
        %v335 = vpop.f32.mrf.mxu0
        %v336 = vadd.f32 %v275, %v335
        %337 = vmatmul.bf16.gmra.mxu0 %v274
        %v338 = vpop.f32.mrf.mxu0
        %v339 = vadd.f32 %v275, %v338
        %v340 = vpop.f32.mrf.mxu0
        %v341 = vadd.f32 %v275, %v340
        %342 = vdwg.mxu0
        %v343 = vmax.f32 %v334, 0.0
        %v344 = vmax.f32 %v336, 0.0
        %v345 = vmax.f32 %v339, 0.0
        %v346 = vmax.f32 %v341, 0.0
        %v347 = vpack.c.bf16 %v344, %v343
        %v348 = vpack.c.bf16 %v346, %v345
        %v349 = vperm.slane %v235, 0
        %v366 = vunpack.c.l.b16 %v218
        %v367 = vunpack.c.l.b16 %v219
        %v368 = vunpack.c.l.b16 %v220
        %v369 = vunpack.c.l.b16 %v221
        %v370 = vunpack.c.l.b16 %v222
        %v371 = vunpack.c.l.b16 %v223
        %v372 = vunpack.c.l.b16 %v224
        %v373 = vunpack.c.l.b16 %v225
        %v374 = vunpack.c.l.b16 %v226
        %v375 = vunpack.c.l.b16 %v227
        %v376 = vunpack.c.l.b16 %v228
        %v377 = vunpack.c.l.b16 %v229
        %v378 = vunpack.c.l.b16 %v230
        %v379 = vunpack.c.l.b16 %v231
        %v380 = vunpack.c.l.b16 %v232
        %v381 = vunpack.c.l.b16 %v233
        %v382 = vpack.c.b16 %v367, %v366
        %v383 = vpack.c.b16 %v369, %v368
        %v384 = vpack.c.b16 %v371, %v370
        %v385 = vpack.c.b16 %v373, %v372
        %v386 = vpack.c.b16 %v375, %v374
        %v387 = vpack.c.b16 %v377, %v376
        %v388 = vpack.c.b16 %v379, %v378
        %v389 = vpack.c.b16 %v381, %v380
        %398 = vmatpush.bf16.msra.mxu0 %v389
        %399 = vmatpush.bf16.msra.mxu0 %v388
        %400 = vmatpush.bf16.msra.mxu0 %v387
        %401 = vmatpush.bf16.msra.mxu0 %v386
        %402 = vmatpush.bf16.msra.mxu0 %v385
        %403 = vmatpush.bf16.msra.mxu0 %v384
        %404 = vmatpush.bf16.msra.mxu0 %v383
        %405 = vmatpush.bf16.msra.mxu0 %v382
        %406 = vmatmul.bf16.gmra.mxu0 %v347
        %v407 = vpop.f32.mrf.mxu0
        %v408 = vadd.f32 %v349, %v407
        %v409 = vpop.f32.mrf.mxu0
        %v410 = vadd.f32 %v349, %v409
        %411 = vmatmul.bf16.gmra.mxu0 %v348
        %v412 = vpop.f32.mrf.mxu0
        %v413 = vadd.f32 %v349, %v412
        %v414 = vpop.f32.mrf.mxu0
        %v415 = vadd.f32 %v349, %v414
        %416 = vdwg.mxu0
        %417 = vmax.xlane.f32.xlu0 %v408
        %v418 = vpop.xlane.xlu0 %417
        %419 = vmax.xlane.f32.xlu0 %v410
        %v420 = vpop.xlane.xlu0 %419
        %421 = vmax.xlane.f32.xlu0 %v413
        %v422 = vpop.xlane.xlu0 %421
        %423 = vmax.xlane.f32.xlu0 %v415
        %v424 = vpop.xlane.xlu0 %423
        %v425 = vsub.f32 %v408, %v418
        %v426 = vsub.f32 %v410, %v420
        %v427 = vsub.f32 %v413, %v422
        %v428 = vsub.f32 %v415, %v424
        %v429 = vmul.f32 %v425, 1.442695
        %v430 = vpow.pop %v429
        %v431 = vmul.f32 %v426, 1.442695
        %v432 = vpow.pop %v431
        %v433 = vmul.f32 %v427, 1.442695
        %v434 = vpow.pop %v433
        %v435 = vmul.f32 %v428, 1.442695
        %v436 = vpow.pop %v435
        %437 = vadd.xlane.f32.xlu0 %v430
        %v438 = vpop.xlane.xlu0 %437
        %439 = vadd.xlane.f32.xlu0 %v432
        %v440 = vpop.xlane.xlu0 %439
        %441 = vadd.xlane.f32.xlu0 %v434
        %v442 = vpop.xlane.xlu0 %441
        %443 = vadd.xlane.f32.xlu0 %v436
        %v444 = vpop.xlane.xlu0 %443
        %v445 = vlog2.pop %v438
        %v446 = vmul.f32 %v445, 0.6931472
        %v447 = vlog2.pop %v440
        %v448 = vmul.f32 %v447, 0.6931472
        %v449 = vlog2.pop %v442
        %v450 = vmul.f32 %v449, 0.6931472
        %v451 = vlog2.pop %v444
        %v452 = vmul.f32 %v451, 0.6931472
        %v453 = vsub.f32 %v425, %v446
        %v454 = vsub.f32 %v426, %v448
        %v455 = vsub.f32 %v427, %v450
        %v456 = vsub.f32 %v428, %v452
        %457 = vst [vmem:[%s181] sm:$0xff] %v453
        %458 = vst [vmem:[%s181 + $0x8] sm:$0xff] %v454
        %459 = vst [vmem:[%s181 + $0x10] sm:$0xff] %v455
        %460 = vst [vmem:[%s181 + $0x18] sm:$0xff] %v456
        %s461 = sand.u32 %s94, 1
        %s462 = scalar_lea.sflag [#allocation4], %s461
        %s463 = sand.u32 %s94, 1
        %s464 = smul.addr %s463, 32
        %s465 = scalar_lea.vmem [#allocation5], %s464
        // Predicated region
        $region37: #{tpu_custom_call.1} parent=31 // pred_check
          %p466 = pneg %p104
        $region38: #{tpu_custom_call.1} parent=31 // pred_check_branch
          %468 = sbr.rel (%p466) target = $region40
        $region39: #{tpu_custom_call.1} parent=31 // pred_region
          %s469 = smul.u32 4, %s18
          %471 = vsyncadd %s462, 0
          %s472 = smul.addr %s469, 8
          %s473 = scalar_lea.hbm %s3, %s472
          %s474 = sshll.u32 %s465, 4
          %s475 = int_to_ptr.vmem [resolvable:$true] %s474
          %s476 = sshll.u32 %s473, 4
          %s477 = int_to_ptr.hbm [resolvable:$true] %s476
          %482 = dma.vmem_to_hbm [thread:$0]  %s475, 512, %s477, %s462, 128, 128, 8
        $region40: #{tpu_custom_call.1} parent=31 // pred_fallthru
          _
      $region32: #{tpu_custom_call.1} parent=5 // pred_fallthru
        _
      %p483 = scmp.le.s32.totalorder 2, %s13
      // Predicated region
      $region41: #{tpu_custom_call.1} parent=5 // pred_check
        %p484 = pneg %p483
      $region42: #{tpu_custom_call.1} parent=5 // pred_check_branch
        %486 = sbr.rel (%p484) target = $region44
      $region43: #{tpu_custom_call.1} parent=5 // pred_region
        %s487 = ssub.s32 %s13, 2
        // Predicated region
        $region45: #{tpu_custom_call.1} parent=43 // pred_check
          %p488 = pneg %p110
        $region46: #{tpu_custom_call.1} parent=43 // pred_check_branch
          %490 = sbr.rel (%p488) target = $region48
        $region47: #{tpu_custom_call.1} parent=43 // pred_region
          %s491 = sand.u32 %s95, 1
          %s492 = scalar_lea.sflag [#allocation4], %s491
          %s493 = sand.u32 %s95, 1
          %s494 = smul.addr %s493, 32
          %s495 = scalar_lea.vmem [#allocation5], %s494
          %497 = dma.done %s492, 512
        $region48: #{tpu_custom_call.1} parent=43 // pred_fallthru
          _
      $region44: #{tpu_custom_call.1} parent=5 // pred_fallthru
        _
    $region6: #{tpu_custom_call.1} parent=1 // loop_footer
      %s17 = sadd.s32 1, %s13
    $region7: #{tpu_custom_call.1} parent=1 // loop_footer_branch
      %12 = sbr.rel target = $region3
    $region8: #{tpu_custom_call.1} parent=1 // loop_exit
      _
    %498 = vsyncpa [#allocation3], 1
    %s499 = scalar_lea.sflag [#allocation3], 1
    %500 = vsyncpa %s499, 1
    %501 = vsyncpa [#allocation4], 1
    %s502 = scalar_lea.sflag [#allocation4], 1
    %503 = vsyncpa %s502, 1

</llo_original>
